<compile_context>
chip_gen: v6e
topology: v6e:2x2x1
jax: 0.10.0
libtpu: 0.0.40
codegen_flags: <defaults>
</compile_context>

<pallas_src>
import functools

import numpy as np
import jax
import jax.numpy as jnp
from jax.experimental import pallas as pl
from jax.experimental.pallas import tpu as pltpu

huffman_tree = {0: [0, 1], 1: [1, 0], 2: [0, 0, 1], 3: [1, 1, 0]}


# ------------------------------- Pallas kernel ------------------------------ #
def hsoftmax_kernel(work_ref, hidden_ref, wt_ref, meta_ref, out_ref,
                    *, tp, batch_size):
    """One (TB x TP) tile of: out += BCEwithLogits(hidden @ Wt, path) * weight.

    work_ref   : (nb, 4) i32  SMEM (scalar prefetch): per batch tile
                 [lo_col, hi_col, lo_blk, hi_blk] of its valid path columns
    hidden_ref : (TB, H) bf16 batch tile of hidden activations
    wt_ref     : (H, TP) bf16 column tile of the packed output-layer slab
    meta_ref   : (TB, 4) i32  per example [col_offset, packed_path_bits, len, 0]
    out_ref    : (TB, TP) f32 per-example partial sums, accumulated over k
    """
    i = pl.program_id(0)
    k = pl.program_id(1)   # MUST stay innermost + "arbitrary": out is resident accumulator

    @pl.when(k == 0)
    def _init():
        out_ref[...] = jnp.zeros_like(out_ref)

    col_lo = k * tp
    # Skip k tiles that contain no valid path column for this batch tile.
    has_work = (work_ref[i, 1] > col_lo) & (work_ref[i, 0] < col_lo + tp)

    @pl.when(has_work)
    def _compute():
        tb = out_ref.shape[0]

        # MXU: bf16 x bf16 -> f32 accumulate.
        logits = jnp.dot(hidden_ref[...], wt_ref[...],
                         preferred_element_type=jnp.float32)          # (TB, TP)

        # Rebuild target / mask for this tile from per-example metadata (VPU).
        meta = meta_ref[...]                                          # (TB, 4)
        off = meta[:, 0:1]
        bits = meta[:, 1:2]
        plen = meta[:, 2:3]
        col = col_lo + jax.lax.broadcasted_iota(jnp.int32, (tb, tp), 1)
        rel = col - off                                               # (TB, TP)
        valid = (rel >= 0) & (rel < plen)                             # path mask
        target = (jnp.right_shift(bits, jnp.clip(rel, 0, 30)) & 1
                  ).astype(jnp.float32)

        # Numerically stable BCE-with-logits, all f32 (VPU + EUP).
        bce = (jnp.maximum(logits, 0.0) - logits * target
               + jnp.log1p(jnp.exp(-jnp.abs(logits))))

        # Fold mask + per-example mean over path length + 1/B into ONE weight.
        plen_f = jnp.maximum(plen, 1).astype(jnp.float32)
        w = jnp.where(valid, 1.0 / (plen_f * float(batch_size)), 0.0)
        out_ref[...] += bce * w


# --------------------------------- wrapper ---------------------------------- #
def _pick_tile(total, cap, align):
    """Largest divisor of `total` that is a multiple of `align` and <= cap."""
    if total <= align or total % align != 0:
        return total
    best = align
    d = align
    while d <= min(total, cap):
        if total % d == 0:
            best = d
        d += align
    return best


def _default_tb(batch):
    """Batch tile: multiple of 16 (bf16 sublane packing), and nb >= 2 when the
    batch allows so the 'parallel' axis actually shards across v7x's two TCs,
    while staying large enough that wt is re-streamed at most ~twice."""
    if batch % 16 != 0:
        return batch
    cap = max(16, min(512, batch // 2 if batch >= 32 else batch))
    return _pick_tile(batch, cap, 16)


@functools.partial(jax.jit, static_argnames=("tb", "tp"))
def hierarchical_softmax_loss(hidden, wt, meta, *, tb=None, tp=None):
    """Batch-mean hierarchical-softmax loss.

    hidden : (B, H) f32   (cast to bf16 in here, per call — it is the small array)
    wt     : (H, P) bf16  packed output-layer slab, ALREADY bf16 (cast once at init)
    meta   : (B, 4) i32   per example [col_offset, packed_path_bits, path_len, 0]
    """
    assert wt.dtype == jnp.bfloat16, "store the wt slab in bf16 once at init"
    B, H = hidden.shape
    P = wt.shape[1]
    if tb is None:
        tb = _default_tb(B)
    if tp is None:
        tp = _pick_tile(P, 512, 128)    # lane-dense N tile, VMEM-friendly on v7x
    assert B % tb == 0 and P % tp == 0
    nb, nk = B // tb, P // tp

    # Per-batch-tile valid-column range (tiny; traced alongside the call).
    off_t = meta[:, 0].reshape(nb, tb)
    plen_t = meta[:, 2].reshape(nb, tb)
    valid_t = plen_t > 0
    lo = jnp.min(jnp.where(valid_t, off_t, jnp.int32(P)), axis=1)
    hi = jnp.max(jnp.where(valid_t, off_t + plen_t, jnp.int32(0)), axis=1)
    lo = jnp.minimum(lo, hi)                       # empty tile -> [0, 0)
    lo_blk = lo // tp
    hi_blk = jnp.maximum(hi - 1, 0) // tp
    work = jnp.stack([lo, hi, lo_blk, hi_blk], axis=1).astype(jnp.int32)

    def wt_index_map(i, k, work_ref):
        # Clamp k into this batch tile's block range: gated-off steps reuse the
        # previous block, so their wt DMA is elided.
        kk = jnp.minimum(jnp.maximum(k, work_ref[i, 2]), work_ref[i, 3])
        return (0, kk)

    grid_spec = pltpu.PrefetchScalarGridSpec(
        num_scalar_prefetch=1,
        grid=(nb, nk),
        in_specs=[
            pl.BlockSpec((tb, H), lambda i, k, w: (i, 0)),
            pl.BlockSpec((H, tp), wt_index_map),
            pl.BlockSpec((tb, 4), lambda i, k, w: (i, 0)),
        ],
        out_specs=pl.BlockSpec((tb, tp), lambda i, k, w: (i, 0)),
    )

    partial = pl.pallas_call(
        functools.partial(hsoftmax_kernel, tp=tp, batch_size=B),
        out_shape=jax.ShapeDtypeStruct((B, tp), jnp.float32),
        grid_spec=grid_spec,
        compiler_params=pltpu.CompilerParams(
            dimension_semantics=("parallel", "arbitrary")),
    )(work, hidden.astype(jnp.bfloat16), wt, meta)

    # Lane-dense per-example partial sums -> scalar batch-mean loss.
    return jnp.sum(partial)


# ------------------------------- glue / setup ------------------------------- #
def build_tree_params(tree, hidden_dim, key):
    """Init each nn.Linear(hidden_dim, len(path), bias=False) with the PyTorch
    default U(-1/sqrt(H), 1/sqrt(H)) and pack them into one (H, P_pad) slab."""
    words = sorted(tree.keys())
    max_len = max(len(p) for p in tree.values())
    assert max_len <= 31, "path bits are packed into a single int32"
    P = len(words) * max_len
    P_pad = max(128, ((P + 127) // 128) * 128)   # lane-dense, zero-padded

    wt = np.zeros((hidden_dim, P_pad), np.float32)
    word_meta = {}  # word -> (col_offset, path f32 array, length, raw W (L,H))
    bound = 1.0 / np.sqrt(hidden_dim)
    for ti, w in enumerate(words):
        path = np.asarray(tree[w], np.float32)
        L = len(path)
        W = np.asarray(jax.random.uniform(jax.random.fold_in(key, w),
                                          (L, hidden_dim), jnp.float32,
                                          -bound, bound))
        col = ti * max_len
        wt[:, col:col + L] = W.T
        word_meta[w] = (col, path, L, W)
    return wt, word_meta, P_pad


def prepare_meta(target_words, word_meta, batch):
    """Expand the Python-dict path lookup into one packed (B, 4) int32 array:
    [col_offset, packed_path_bits, path_len, 0]."""
    meta = np.zeros((batch, 4), np.int32)
    for b, w in enumerate(np.asarray(target_words)):
        w = int(w)
        if w in word_meta:
            col, path, L, _ = word_meta[w]
            assert L <= 31
            meta[b, 0] = col
            meta[b, 1] = int(sum(int(p) << j for j, p in enumerate(path)))
            meta[b, 2] = L
    return meta


def reference_loss(hidden_f32, target_words, word_meta):
    """Numpy re-implementation of the PyTorch forward, with hidden/weights
    rounded to bf16 exactly like the kernel's MXU inputs (f32 accumulation)."""
    def to_bf16(a):
        return np.asarray(jnp.asarray(a, jnp.float32)
                          .astype(jnp.bfloat16).astype(jnp.float32))
    hidden_b = to_bf16(hidden_f32)
    B = hidden_b.shape[0]
    total = 0.0
    for i, w in enumerate(np.asarray(target_words)):
        w = int(w)
        if w in word_meta:
            _, path, _, W = word_meta[w]
            x = to_bf16(W) @ hidden_b[i]
            bce = np.maximum(x, 0.0) - x * path + np.log1p(np.exp(-np.abs(x)))
            total += bce.mean()
    return np.float32(total / B)


def _run_case(name, tree, batch, hidden_dim, vocab_hi, key, tile_cfgs):
    k_w, k_h, k_t = jax.random.split(key, 3)
    wt_np, word_meta, _ = build_tree_params(tree, hidden_dim, k_w)
    hidden = jax.random.normal(k_h, (batch, hidden_dim), jnp.float32)
    # Some target words fall outside the tree: they contribute 0 loss but still
    # count in the 1/B batch mean, matching the PyTorch forward.
    target_words = jax.random.randint(k_t, (batch,), 0, vocab_hi)
    meta = jnp.asarray(prepare_meta(target_words, word_meta, batch))

    wt = jnp.asarray(wt_np).astype(jnp.bfloat16)   # cast ONCE at init
    ref = reference_loss(np.asarray(hidden), target_words, word_meta)

    for cfg in tile_cfgs:
        loss = hierarchical_softmax_loss(hidden, wt, meta, **cfg)
        loss = jax.block_until_ready(loss)
        assert np.allclose(np.asarray(loss), ref, rtol=1e-3, atol=1e-4), \
            (name, cfg, float(loss), float(ref))


if __name__ == "__main__":
    key = jax.random.PRNGKey(0)
    k1, k2 = jax.random.split(key)

    # Case 1: the module's own tiny Huffman tree at the spec shapes (B=32,
    # H=512).  Default tiles give grid (2, 1): the batch-parallel axis has two
    # tiles (both TCs busy on v7x) and the whole 128-wide slab is one k block.
    _run_case("huffman4", huffman_tree, 32, 512, 8, k1,
              [dict(), dict(tb=16, tp=128)])

    # Case 2: a larger synthetic tree (96 words, path lengths 2..8 -> P_pad=768)
    # so the P-axis reduction (nk > 1), the work-range gating and the wt-block
    # clamping actually run: default tiles give grid (2, 2); (tb=16, tp=128)
    # gives grid (4, 6) where most (i, k) tiles are gated off.
    synth_tree = {w: [((w >> j) ^ (w + j)) & 1 for j in range(2 + w % 7)]
                  for w in range(96)}
    _run_case("synth96", synth_tree, 64, 256, 192, k2,
              [dict(), dict(tb=16, tp=128)])

    print("KERNEL_OK")
</pallas_src>

<mosaic_0001>
module attributes {stable_mosaic.version = 11 : i64} {
  func.func @hsoftmax_kernel(%arg0: i32, %arg1: i32, %arg2: memref<2x4xi32, #tpu.memory_space<smem>>, %arg3: memref<16x512xbf16, #tpu.memory_space<vmem>>, %arg4: memref<512x128xbf16, #tpu.memory_space<vmem>>, %arg5: memref<16x4xi32, #tpu.memory_space<vmem>>, %arg6: memref<16x128xf32, #tpu.memory_space<vmem>>) attributes {dimension_semantics = [#tpu.dimension_semantics<parallel>, #tpu.dimension_semantics<arbitrary>], iteration_bounds = array<i64: 2, 1>, scalar_prefetch = 1 : i64, scratch_operands = 0 : i64, tpu.core_type = #tpu.core_type<tc>, window_params = [{transform_indices = @transform_0, window_bounds = array<i64: 16, 512>}, {transform_indices = @transform_1, window_bounds = array<i64: 512, 128>}, {transform_indices = @transform_2, window_bounds = array<i64: 16, 4>}, {transform_indices = @transform_3, window_bounds = array<i64: 16, 128>}]} {
    %c0_i32 = arith.constant 0 : i32
    %0 = arith.cmpi eq, %arg1, %c0_i32 : i32
    %1 = arith.extui %0 : i1 to i32
    %c0_i32_0 = arith.constant 0 : i32
    %2 = arith.cmpi ne, %1, %c0_i32_0 : i32
    scf.if %2 {
      %cst = arith.constant 0.000000e+00 : f32
      %14 = vector.broadcast %cst : f32 to vector<16x128xf32>
      %c0_3 = arith.constant 0 : index
      %c0_4 = arith.constant 0 : index
      %15 = vector.load %arg6[%c0_3, %c0_4] : memref<16x128xf32, #tpu.memory_space<vmem>>, vector<16x128xf32>
      tpu.vector_store %arg6[%c0_3, %c0_4], %14 {strides = array<i32>} : memref<16x128xf32, #tpu.memory_space<vmem>>, vector<16x128xf32>,
    } else {
    }
    %c128_i32 = arith.constant 128 : i32
    %3 = arith.muli %arg1, %c128_i32 : i32
    %4 = arith.index_cast %arg0 : i32 to index
    %c1 = arith.constant 1 : index
    %5 = memref.load %arg2[%4, %c1] : memref<2x4xi32, #tpu.memory_space<smem>>
    %6 = arith.cmpi sgt, %5, %3 : i32
    %7 = arith.index_cast %arg0 : i32 to index
    %c0 = arith.constant 0 : index
    %8 = memref.load %arg2[%7, %c0] : memref<2x4xi32, #tpu.memory_space<smem>>
    %c128_i32_1 = arith.constant 128 : i32
    %9 = arith.addi %3, %c128_i32_1 : i32
    %10 = arith.cmpi slt, %8, %9 : i32
    %11 = arith.andi %6, %10 : i1
    %12 = arith.extui %11 : i1 to i32
    %c0_i32_2 = arith.constant 0 : i32
    %13 = arith.cmpi ne, %12, %c0_i32_2 : i32
    scf.if %13 {
      %c0_3 = arith.constant 0 : index
      %c0_4 = arith.constant 0 : index
      %14 = vector.load %arg3[%c0_3, %c0_4] : memref<16x512xbf16, #tpu.memory_space<vmem>>, vector<16x512xbf16>
      %c0_5 = arith.constant 0 : index
      %c0_6 = arith.constant 0 : index
      %15 = vector.load %arg4[%c0_5, %c0_6] : memref<512x128xbf16, #tpu.memory_space<vmem>>, vector<512x128xbf16>
      %cst = arith.constant dense<0.000000e+00> : vector<16x128xf32>
      %16 = tpu.matmul %14, %15, %cst {dimension_numbers = #tpu.dot_dimension_numbers<[1], [0], [0], [1], [0, 0, 1, 1], [], []>} : vector<16x512xbf16>, vector<512x128xbf16>, vector<16x128xf32> -> vector<16x128xf32>
      %c0_7 = arith.constant 0 : index
      %c0_8 = arith.constant 0 : index
      %17 = vector.load %arg5[%c0_7, %c0_8] : memref<16x4xi32, #tpu.memory_space<vmem>>, vector<16x4xi32>
      %18 = vector.extract_strided_slice %17 {offsets = [0, 0], sizes = [16, 1], strides = [1, 1]} : vector<16x4xi32> to vector<16x1xi32>
      %19 = vector.extract_strided_slice %17 {offsets = [0, 1], sizes = [16, 1], strides = [1, 1]} : vector<16x4xi32> to vector<16x1xi32>
      %20 = vector.extract_strided_slice %17 {offsets = [0, 2], sizes = [16, 1], strides = [1, 1]} : vector<16x4xi32> to vector<16x1xi32>
      %21 = tpu.iota {dimensions = array<i32: 1>} : vector<16x128xi32>
      %22 = vector.broadcast %3 : i32 to vector<16x128xi32>
      %23 = arith.addi %22, %21 : vector<16x128xi32>
      %24 = vector.broadcast %18 : vector<16x1xi32> to vector<16x128xi32>
      %25 = arith.subi %23, %24 : vector<16x128xi32>
      %c0_i32_9 = arith.constant 0 : i32
      %26 = vector.broadcast %c0_i32_9 : i32 to vector<16x128xi32>
      %27 = arith.cmpi sge, %25, %26 : vector<16x128xi32>
      %28 = vector.broadcast %20 : vector<16x1xi32> to vector<16x128xi32>
      %29 = arith.cmpi slt, %25, %28 : vector<16x128xi32>
      %30 = arith.andi %27, %29 : vector<16x128xi1>
      %c0_i32_10 = arith.constant 0 : i32
      %c30_i32 = arith.constant 30 : i32
      %31 = vector.broadcast %c0_i32_10 : i32 to vector<16x128xi32>
      %32 = arith.maxsi %31, %25 : vector<16x128xi32>
      %33 = vector.broadcast %c30_i32 : i32 to vector<16x128xi32>
      %34 = arith.minsi %33, %32 : vector<16x128xi32>
      %35 = vector.broadcast %19 : vector<16x1xi32> to vector<16x128xi32>
      %36 = arith.shrsi %35, %34 : vector<16x128xi32>
      %c1_i32 = arith.constant 1 : i32
      %37 = vector.broadcast %c1_i32 : i32 to vector<16x128xi32>
      %38 = arith.andi %36, %37 : vector<16x128xi32>
      %39 = arith.sitofp %38 : vector<16x128xi32> to vector<16x128xf32>
      %cst_11 = arith.constant 0.000000e+00 : f32
      %40 = vector.broadcast %cst_11 : f32 to vector<16x128xf32>
      %41 = arith.maximumf %16, %40 : vector<16x128xf32>
      %42 = arith.mulf %16, %39 : vector<16x128xf32>
      %43 = arith.subf %41, %42 : vector<16x128xf32>
      %44 = math.absf %16 : vector<16x128xf32>
      %cst_12 = arith.constant 0.000000e+00 : f32
      %45 = vector.broadcast %cst_12 : f32 to vector<16x128xf32>
      %46 = arith.subf %45, %44 : vector<16x128xf32>
      %47 = math.exp %46 : vector<16x128xf32>
      %48 = math.log1p %47 : vector<16x128xf32>
      %49 = arith.addf %43, %48 : vector<16x128xf32>
      %c1_i32_13 = arith.constant 1 : i32
      %50 = vector.broadcast %c1_i32_13 : i32 to vector<16x1xi32>
      %51 = arith.maxsi %20, %50 : vector<16x1xi32>
      %52 = arith.sitofp %51 : vector<16x1xi32> to vector<16x1xf32>
      %cst_14 = arith.constant 3.200000e+01 : f32
      %53 = vector.broadcast %cst_14 : f32 to vector<16x1xf32>
      %54 = arith.mulf %52, %53 : vector<16x1xf32>
      %cst_15 = arith.constant 1.000000e+00 : f32
      %55 = vector.broadcast %cst_15 : f32 to vector<16x1xf32>
      %56 = arith.divf %55, %54 : vector<16x1xf32>
      %cst_16 = arith.constant 0.000000e+00 : f32
      %57 = vector.shape_cast %56 : vector<16x1xf32> to vector<16x1xf32>
      %58 = vector.broadcast %57 : vector<16x1xf32> to vector<16x128xf32>
      %59 = vector.broadcast %cst_16 : f32 to vector<16x128xf32>
      %60 = arith.select %30, %58, %59 : vector<16x128xi1>, vector<16x128xf32>
      %c0_17 = arith.constant 0 : index
      %c0_18 = arith.constant 0 : index
      %61 = vector.load %arg6[%c0_17, %c0_18] : memref<16x128xf32, #tpu.memory_space<vmem>>, vector<16x128xf32>
      %62 = arith.mulf %49, %60 : vector<16x128xf32>
      %63 = arith.addf %61, %62 : vector<16x128xf32>
      %c0_19 = arith.constant 0 : index
      %c0_20 = arith.constant 0 : index
      %64 = vector.load %arg6[%c0_19, %c0_20] : memref<16x128xf32, #tpu.memory_space<vmem>>, vector<16x128xf32>
      tpu.vector_store %arg6[%c0_19, %c0_20], %63 {strides = array<i32>} : memref<16x128xf32, #tpu.memory_space<vmem>>, vector<16x128xf32>,
    } else {
    }
    return
  }
  func.func @transform_0(%arg0: i32, %arg1: i32, %arg2: memref<2x4xi32, #tpu.memory_space<smem>>) -> (i32, i32) {
    %c0_i32 = arith.constant 0 : i32
    %c0_i32_0 = arith.constant 0 : i32
    return %arg0, %c0_i32 : i32, i32
  }
  func.func @transform_1(%arg0: i32, %arg1: i32, %arg2: memref<2x4xi32, #tpu.memory_space<smem>>) -> (i32, i32) {
    %0 = arith.index_cast %arg0 : i32 to index
    %c2 = arith.constant 2 : index
    %1 = memref.load %arg2[%0, %c2] : memref<2x4xi32, #tpu.memory_space<smem>>
    %2 = arith.maxsi %arg1, %1 : i32
    %3 = arith.index_cast %arg0 : i32 to index
    %c3 = arith.constant 3 : index
    %4 = memref.load %arg2[%3, %c3] : memref<2x4xi32, #tpu.memory_space<smem>>
    %5 = arith.minsi %2, %4 : i32
    %c0_i32 = arith.constant 0 : i32
    %c0_i32_0 = arith.constant 0 : i32
    return %c0_i32, %5 : i32, i32
  }
  func.func @transform_2(%arg0: i32, %arg1: i32, %arg2: memref<2x4xi32, #tpu.memory_space<smem>>) -> (i32, i32) {
    %c0_i32 = arith.constant 0 : i32
    %c0_i32_0 = arith.constant 0 : i32
    return %arg0, %c0_i32 : i32, i32
  }
  func.func @transform_3(%arg0: i32, %arg1: i32, %arg2: memref<2x4xi32, #tpu.memory_space<smem>>) -> (i32, i32) {
    %c0_i32 = arith.constant 0 : i32
    %c0_i32_0 = arith.constant 0 : i32
    return %arg0, %c0_i32 : i32, i32
  }
}

</mosaic_0001>

<llo_original>
// kernel: squeeze.3
$region0: #{squeeze.3}
  %s0 = inlined_call_operand.vmem [shape: s32[32], index: 0, kind: input, shape index: {}]
  %s1 = inlined_call_operand.vmem [shape: s32[2,16], index: 1, kind: output, shape index: {}]
  $region1: #{squeeze.3} parent=0
    #allocation0 [shape = 'u8[4096]{0}', space=vmem, size = 0x1000, scoped, tag = 'scoped mem for output reshape']
    #allocation1 [shape = 'u8[4096]{0}', space=vmem, size = 0x1000, scoped, tag = 'scoped mem for input reshape']
    %s3 = sshll.u32 1, 1
    %s4 = ssub.s32 %s3, 1
    %v5 = vld [vmem:[%s0] sm:%s4]
    %6 = vst [vmem:[#allocation1] sm:%s4] %v5
    %v7 = vld [vmem:[#allocation1] sm:$0x1]
    %vm8 = vcmask 130048
    %9 = vst.msk [vmem:[#allocation0] sm:$0x1] %vm8, %v7
    %v10 = vld [vmem:[#allocation1] sm:$0x1]
    %11 = vrot.lane.b32.xlu0 %v10, 112
    %v12 = vpop.permute.xlu0 %11
    %vm13 = vcmask 130048
    %s14 = scalar_lea.vmem [#allocation0], 1
    %15 = vst.msk [vmem:[%s14] sm:$0x1] %vm13, %v12
    %s17 = sshll.u32 1, 2
    %s18 = ssub.s32 %s17, 1
    %v20 = vld [vmem:[#allocation0] sm:%s18]
    %s21 = sshll.u32 1, 2
    %s22 = ssub.s32 %s21, 1
    %23 = vst [vmem:[%s1] sm:%s22] %v20

// kernel: hierarchical_softmax_loss.1
$region0: #{hierarchical_softmax_loss.1}
  #allocation0 [shape = 'u32[]', space=smem, size = 0x4, offset = 0x4, fixed_abs, tag = 'smem constant byte address 0x4 - core index']
  #allocation1 [shape = 'u32[144,128]{1,0:T(1,128)}', space=vmem, size = 0x12000, scoped, tag = 'internal scratch']
  #allocation2 [shape = 's32[1]{0}', space=sflag, size = 0x4, scoped, tag = 'scoped memory for hierarchical_softmax_loss.1']
  #allocation3 [shape = 'u8[1024]{0}', space=smem, size = 0x400, scoped, tag = 'prefetched SMEM operand 0']
  %s0 = inlined_call_operand.vmem [shape: s32[2,4], index: 0, kind: input, shape index: {}]
  %s1 = inlined_call_operand.vmem [shape: bf16[32,512], index: 1, kind: input, shape index: {}]
  %s2 = inlined_call_operand.vmem [shape: bf16[512,128], index: 2, kind: input, shape index: {}]
  %s3 = inlined_call_operand.vmem [shape: s32[32,4], index: 3, kind: input, shape index: {}]
  %s4 = inlined_call_operand.vmem [shape: f32[32,128], index: 4, kind: output, shape index: {}]
  %s5 = sld [smem:[#allocation0]]
  $region53: #{hierarchical_softmax_loss.1} parent=0
    _
  %s7 = ssub.s32 1, %s5
  %s8 = scalar_select 0, %s7, %s5
  %s9 = sshll.u32 %s0, 4
  %s10 = int_to_ptr.vmem [resolvable:$true] %s9
  %12 = dma.vmem_to_smem %s10, 32, [#allocation3], [#allocation2]
  %13 = dma.done [#allocation2], 32
  %14 = sfence
  loop: start=0, step=1, limit=4
  $region2: #{hierarchical_softmax_loss.1} parent=0 // loop_pre_header
    _
  $region3: #{hierarchical_softmax_loss.1} parent=0 // loop_header
    %s16 = sphi 0, %s20
    %p17 = scmp.ge.s32.totalorder %s16, 4
    %s23 = sphi 0, %s35
    %s24 = sphi 0, %s31
    %s25 = sphi 0, %s23
    %s26 = sphi 0, %s24
    %s27 = sphi 0, %s25
    %s28 = sphi 0, %s26
    %s38 = sphi 0, %s40
    %s41 = sphi 0, %s38
    %s42 = sphi 0, %s41
    %s58 = sphi 0, %s42
    %s82 = sphi 0, %s84
    %s85 = sphi 0, %s82
    %s86 = sphi 0, %s85
    %s102 = sphi 0, %s86
    %s108 = sphi 0, %s110
    %s111 = sphi 0, %s108
    %s112 = sphi 0, %s111
    %s128 = sphi 0, %s112
    %s134 = sphi 0, %s136
    %s137 = sphi 0, %s134
    %s138 = sphi 0, %s137
    %s154 = sphi 0, %s138
  $region4: #{hierarchical_softmax_loss.1} parent=0 // loop_header_branch
    %19 = sbr.rel (%p17) target = $region8
  $region5: #{hierarchical_softmax_loss.1} parent=0 // loop_body
    %s21 = ssub.s32 %s16, 1
    %s22 = ssub.s32 %s16, 2
    %s29 = sadd.s32 1, %s24
    %p30 = scmp.ge.s32.totalorder %s29, 1
    %s31 = scalar_select %p30, 0, %s29
    %s32 = sadd.s32 1, %s23
    %s33 = scalar_select %p30, %s32, %s23
    %p34 = scmp.ge.s32.totalorder %s33, 2
    %s35 = scalar_select %p34, 0, %s33
    %s36 = ssub.s32 %s23, %s35
    %p37 = scmp.eq.s32.totalorder %s36, 0
    %s39 = sadd.s32 %s38, 1
    %s40 = scalar_select %p37, %s38, %s39
    %p43 = pneg %p37
    %p44 = scmp.eq.s32.totalorder %s16, 1
    %p45 = por %p43, %p44
    %p46 = scmp.ne.s32.totalorder %s38, %s41
    %p47 = scmp.eq.s32.totalorder %s16, 0
    %p48 = por %p46, %p47
    %p49 = scmp.ne.s32.totalorder %s38, %s41
    %p50 = scmp.eq.s32.totalorder %s21, 1
    %p51 = por %p49, %p50
    %p52 = scmp.ne.s32.totalorder %s41, %s42
    %p53 = scmp.eq.s32.totalorder %s21, 0
    %p54 = por %p52, %p53
    %p55 = scmp.ne.s32.totalorder %s41, %s42
    %p56 = scmp.eq.s32.totalorder %s22, 1
    %p57 = por %p55, %p56
    %p59 = scmp.ne.s32.totalorder %s42, %s58
    %p60 = scmp.eq.s32.totalorder %s22, 0
    %p61 = por %p59, %p60
    %s62 = smul.u32 %s23, 128
    %s63 = sadd.s32 %s62, 2
    %s64 = sld [smem:[#allocation3 + %s63]]
    %p65 = scmp.gt.s32.totalorder %s24, %s64
    %s66 = scalar_select %p65, %s24, %s64
    %s67 = sadd.s32 %s62, 3
    %s68 = sld [smem:[#allocation3 + %s67]]
    %p69 = scmp.lt.s32.totalorder %s66, %s68
    %s70 = scalar_select %p69, %s66, %s68
    %s71 = smul.u32 %s35, 128
    %s72 = sadd.s32 %s71, 2
    %s73 = sld [smem:[#allocation3 + %s72]]
    %p74 = scmp.gt.s32.totalorder %s31, %s73
    %s75 = scalar_select %p74, %s31, %s73
    %s76 = sadd.s32 %s71, 3
    %s77 = sld [smem:[#allocation3 + %s76]]
    %p78 = scmp.lt.s32.totalorder %s75, %s77
    %s79 = scalar_select %p78, %s75, %s77
    %s80 = ssub.s32 %s70, %s79
    %p81 = scmp.eq.s32.totalorder %s80, 0
    %s83 = sadd.s32 %s82, 1
    %s84 = scalar_select %p81, %s82, %s83
    %p87 = pneg %p81
    %p88 = scmp.eq.s32.totalorder %s16, 1
    %p89 = por %p87, %p88
    %p90 = scmp.ne.s32.totalorder %s82, %s85
    %p91 = scmp.eq.s32.totalorder %s16, 0
    %p92 = por %p90, %p91
    %p93 = scmp.ne.s32.totalorder %s82, %s85
    %p94 = scmp.eq.s32.totalorder %s21, 1
    %p95 = por %p93, %p94
    %p96 = scmp.ne.s32.totalorder %s85, %s86
    %p97 = scmp.eq.s32.totalorder %s21, 0
    %p98 = por %p96, %p97
    %p99 = scmp.ne.s32.totalorder %s85, %s86
    %p100 = scmp.eq.s32.totalorder %s22, 1
    %p101 = por %p99, %p100
    %p103 = scmp.ne.s32.totalorder %s86, %s102
    %p104 = scmp.eq.s32.totalorder %s22, 0
    %p105 = por %p103, %p104
    %s106 = ssub.s32 %s23, %s35
    %p107 = scmp.eq.s32.totalorder %s106, 0
    %s109 = sadd.s32 %s108, 1
    %s110 = scalar_select %p107, %s108, %s109
    %p113 = pneg %p107
    %p114 = scmp.eq.s32.totalorder %s16, 1
    %p115 = por %p113, %p114
    %p116 = scmp.ne.s32.totalorder %s108, %s111
    %p117 = scmp.eq.s32.totalorder %s16, 0
    %p118 = por %p116, %p117
    %p119 = scmp.ne.s32.totalorder %s108, %s111
    %p120 = scmp.eq.s32.totalorder %s21, 1
    %p121 = por %p119, %p120
    %p122 = scmp.ne.s32.totalorder %s111, %s112
    %p123 = scmp.eq.s32.totalorder %s21, 0
    %p124 = por %p122, %p123
    %p125 = scmp.ne.s32.totalorder %s111, %s112
    %p126 = scmp.eq.s32.totalorder %s22, 1
    %p127 = por %p125, %p126
    %p129 = scmp.ne.s32.totalorder %s112, %s128
    %p130 = scmp.eq.s32.totalorder %s22, 0
    %p131 = por %p129, %p130
    %s132 = ssub.s32 %s23, %s35
    %p133 = scmp.eq.s32.totalorder %s132, 0
    %s135 = sadd.s32 %s134, 1
    %s136 = scalar_select %p133, %s134, %s135
    %p139 = pneg %p133
    %p140 = scmp.eq.s32.totalorder %s16, 1
    %p141 = por %p139, %p140
    %p142 = scmp.ne.s32.totalorder %s134, %s137
    %p143 = scmp.eq.s32.totalorder %s16, 0
    %p144 = por %p142, %p143
    %p145 = scmp.ne.s32.totalorder %s134, %s137
    %p146 = scmp.eq.s32.totalorder %s21, 1
    %p147 = por %p145, %p146
    %p148 = scmp.ne.s32.totalorder %s137, %s138
    %p149 = scmp.eq.s32.totalorder %s21, 0
    %p150 = por %p148, %p149
    %p151 = scmp.ne.s32.totalorder %s137, %s138
    %p152 = scmp.eq.s32.totalorder %s22, 1
    %p153 = por %p151, %p152
    %p155 = scmp.ne.s32.totalorder %s138, %s154
    %p156 = scmp.eq.s32.totalorder %s22, 0
    %p157 = por %p155, %p156
    %p158 = scmp.le.s32.totalorder 1, %s16
    %p159 = scmp.lt.s32.totalorder %s16, 3
    %p160 = pnand %p158, %p159
    %p161 = pneg %p160
    // Predicated region
    $region9: #{hierarchical_softmax_loss.1} parent=5 // pred_check
      _
    $region10: #{hierarchical_softmax_loss.1} parent=5 // pred_check_branch
      %163 = sbr.rel (%p160) target = $region12
    $region11: #{hierarchical_softmax_loss.1} parent=5 // pred_region
      %s164 = ssub.s32 %s16, 1
    $region12: #{hierarchical_softmax_loss.1} parent=5 // pred_fallthru
      _
    %p165 = scmp.lt.s32.totalorder %s16, 2
    // Predicated region
    $region13: #{hierarchical_softmax_loss.1} parent=5 // pred_check
      %p166 = pneg %p165
    $region14: #{hierarchical_softmax_loss.1} parent=5 // pred_check_branch
      %168 = sbr.rel (%p166) target = $region16
    $region15: #{hierarchical_softmax_loss.1} parent=5 // pred_region
      // Predicated region
      $region17: #{hierarchical_softmax_loss.1} parent=15 // pred_check
        %p169 = pneg %p48
      $region18: #{hierarchical_softmax_loss.1} parent=15 // pred_check_branch
        %171 = sbr.rel (%p169) target = $region20
      $region19: #{hierarchical_softmax_loss.1} parent=15 // pred_region
        %s172 = smul.u32 2, %s23
        %p173 = scmp.lt.s32.totalorder %s172, 3
        %s174 = scalar_select %p173, %s172, 3
        %s175 = smul.addr %s174, 4
        %s176 = smul.addr %s175, 4
        %s177 = scalar_lea.vmem %s1, %s176
        %s178 = smul.u32 2, %s23
      $region20: #{hierarchical_softmax_loss.1} parent=15 // pred_fallthru
        _
      // Predicated region
      $region21: #{hierarchical_softmax_loss.1} parent=15 // pred_check
        %p179 = pneg %p92
      $region22: #{hierarchical_softmax_loss.1} parent=15 // pred_check_branch
        %181 = sbr.rel (%p179) target = $region24
      $region23: #{hierarchical_softmax_loss.1} parent=15 // pred_region
        %s182 = smul.u32 %s23, 128
        %s183 = sadd.s32 %s182, 2
        %s184 = sld [smem:[#allocation3 + %s183]]
        %p185 = scmp.gt.s32.totalorder %s24, %s184
        %s186 = scalar_select %p185, %s24, %s184
        %s187 = sadd.s32 %s182, 3
        %s188 = sld [smem:[#allocation3 + %s187]]
        %p189 = scmp.lt.s32.totalorder %s186, %s188
        %s190 = scalar_select %p189, %s186, %s188
        %p191 = scmp.lt.s32.totalorder %s190, 0
        %s192 = scalar_select %p191, %s190, 0
        %s193 = smul.addr %s192, 4
        %s194 = scalar_lea.vmem %s2, %s193
        %s195 = smul.u32 %s23, 128
        %s196 = sadd.s32 %s195, 2
        %s197 = sld [smem:[#allocation3 + %s196]]
        %p198 = scmp.gt.s32.totalorder %s24, %s197
        %s199 = scalar_select %p198, %s24, %s197
        %s200 = sadd.s32 %s195, 3
        %s201 = sld [smem:[#allocation3 + %s200]]
        %p202 = scmp.lt.s32.totalorder %s199, %s201
        %s203 = scalar_select %p202, %s199, %s201
      $region24: #{hierarchical_softmax_loss.1} parent=15 // pred_fallthru
        _
      // Predicated region
      $region25: #{hierarchical_softmax_loss.1} parent=15 // pred_check
        %p204 = pneg %p118
      $region26: #{hierarchical_softmax_loss.1} parent=15 // pred_check_branch
        %206 = sbr.rel (%p204) target = $region28
      $region27: #{hierarchical_softmax_loss.1} parent=15 // pred_region
        %s207 = smul.u32 2, %s23
        %p208 = scmp.lt.s32.totalorder %s207, 3
        %s209 = scalar_select %p208, %s207, 3
        %s210 = smul.addr %s209, 8
        %s211 = scalar_lea.vmem %s3, %s210
        %s212 = smul.u32 2, %s23
      $region28: #{hierarchical_softmax_loss.1} parent=15 // pred_fallthru
        _
    $region16: #{hierarchical_softmax_loss.1} parent=5 // pred_fallthru
      _
    %p213 = scmp.le.s32.totalorder 1, %s16
    %p214 = scmp.lt.s32.totalorder %s16, 3
    %p215 = pnand %p213, %p214
    %p216 = pneg %p215
    // Predicated region
    $region29: #{hierarchical_softmax_loss.1} parent=5 // pred_check
      _
    $region30: #{hierarchical_softmax_loss.1} parent=5 // pred_check_branch
      %218 = sbr.rel (%p215) target = $region32
    $region31: #{hierarchical_softmax_loss.1} parent=5 // pred_region
      %s219 = ssub.s32 %s16, 1
      %s220 = smul.u32 2, %s25
      %p221 = scmp.lt.s32.totalorder %s220, 3
      %s222 = scalar_select %p221, %s220, 3
      %s223 = smul.addr %s222, 4
      %s224 = smul.addr %s223, 4
      %s225 = scalar_lea.vmem %s1, %s224
      %p226 = pneg %p54
      %p227 = pneg %p51
      %s228 = smul.u32 %s25, 128
      %s229 = sadd.s32 %s228, 2
      %s230 = sld [smem:[#allocation3 + %s229]]
      %p231 = scmp.gt.s32.totalorder %s26, %s230
      %s232 = scalar_select %p231, %s26, %s230
      %s233 = sadd.s32 %s228, 3
      %s234 = sld [smem:[#allocation3 + %s233]]
      %p235 = scmp.lt.s32.totalorder %s232, %s234
      %s236 = scalar_select %p235, %s232, %s234
      %p237 = scmp.lt.s32.totalorder %s236, 0
      %s238 = scalar_select %p237, %s236, 0
      %s239 = smul.addr %s238, 4
      %s240 = scalar_lea.vmem %s2, %s239
      %p241 = pneg %p98
      %p242 = pneg %p95
      %s243 = smul.u32 2, %s25
      %p244 = scmp.lt.s32.totalorder %s243, 3
      %s245 = scalar_select %p244, %s243, 3
      %s246 = smul.addr %s245, 8
      %s247 = scalar_lea.vmem %s3, %s246
      %p248 = pneg %p124
      %p249 = pneg %p121
      %p250 = pneg %p150
      %p251 = pneg %p147
      %s252 = smul.u32 2, %s25
      %p253 = scmp.lt.s32.totalorder %s252, 3
      %s254 = scalar_select %p253, %s252, 3
      %s255 = smul.addr %s254, 8
      %s256 = scalar_lea.vmem %s4, %s255
      %s257 = smul.u32 2, %s25
      %p258 = scmp.lt.s32.totalorder %s257, 3
      %s259 = scalar_select %p258, %s257, 3
      %s260 = smul.addr %s259, 4
      %s261 = smul.addr %s260, 4
      %s262 = scalar_lea.vmem %s1, %s261
      %s263 = smul.u32 2, %s25
      %s264 = smul.u32 %s25, 128
      %s265 = sadd.s32 %s264, 2
      %s266 = sld [smem:[#allocation3 + %s265]]
      %p267 = scmp.gt.s32.totalorder %s26, %s266
      %s268 = scalar_select %p267, %s26, %s266
      %s269 = sadd.s32 %s264, 3
      %s270 = sld [smem:[#allocation3 + %s269]]
      %p271 = scmp.lt.s32.totalorder %s268, %s270
      %s272 = scalar_select %p271, %s268, %s270
      %p273 = scmp.lt.s32.totalorder %s272, 0
      %s274 = scalar_select %p273, %s272, 0
      %s275 = smul.addr %s274, 4
      %s276 = scalar_lea.vmem %s2, %s275
      %s277 = smul.u32 %s25, 128
      %s278 = sadd.s32 %s277, 2
      %s279 = sld [smem:[#allocation3 + %s278]]
      %p280 = scmp.gt.s32.totalorder %s26, %s279
      %s281 = scalar_select %p280, %s26, %s279
      %s282 = sadd.s32 %s277, 3
      %s283 = sld [smem:[#allocation3 + %s282]]
      %p284 = scmp.lt.s32.totalorder %s281, %s283
      %s285 = scalar_select %p284, %s281, %s283
      %s286 = smul.u32 2, %s25
      %p287 = scmp.lt.s32.totalorder %s286, 3
      %s288 = scalar_select %p287, %s286, 3
      %s289 = smul.addr %s288, 8
      %s290 = scalar_lea.vmem %s3, %s289
      %s291 = smul.u32 2, %s25
      %s292 = smul.u32 2, %s25
      %p293 = scmp.lt.s32.totalorder %s292, 3
      %s294 = scalar_select %p293, %s292, 3
      %s295 = smul.addr %s294, 8
      %s296 = scalar_lea.vmem %s4, %s295
      %s297 = smul.u32 2, %s25
      %p299 = scmp.eq.s32.totalorder %s26, 0
      // Predicated region
      $region33: #{hierarchical_softmax_loss.1} parent=31 // pred_check
        %p300 = pneg %p299
      $region34: #{hierarchical_softmax_loss.1} parent=31 // pred_check_branch
        %302 = sbr.rel (%p300) target = $region36
      $region35: #{hierarchical_softmax_loss.1} parent=31 // pred_region
        %303 = vst [vmem:[%s296] sm:$0xff] 0.0
        %304 = vst [vmem:[%s296 + $0x8] sm:$0xff] 0.0
      $region36: #{hierarchical_softmax_loss.1} parent=31 // pred_fallthru
        _
      %s305 = smul.u32 %s26, 128
      %s306 = smul.u32 %s25, 128
      %s307 = sadd.s32 %s306, 1
      %s308 = sld [smem:[#allocation3 + %s307]]
      %p309 = scmp.gt.s32.totalorder %s308, %s305
      %s310 = sld [smem:[#allocation3 + %s306]]
      %s311 = sadd.s32 %s305, 128
      %p312 = scmp.lt.s32.totalorder %s310, %s311
      %p313 = pnand %p309, %p312
      %p314 = pneg %p313
      // Predicated region
      $region37: #{hierarchical_softmax_loss.1} parent=31 // pred_check
        _
      $region38: #{hierarchical_softmax_loss.1} parent=31 // pred_check_branch
        %316 = sbr.rel (%p313) target = $region40
      $region39: #{hierarchical_softmax_loss.1} parent=31 // pred_region
        %v317 = vld [vmem:[%s262] sm:$0xff]
        %v318 = vld [vmem:[%s262 + $0x8] sm:$0xff]
        %v319 = vld [vmem:[%s262 + $0x10] sm:$0xff]
        %v320 = vld [vmem:[%s262 + $0x18] sm:$0xff]
        %v321 = vld [vmem:[%s276] sm:$0xf]
        %v322 = vld [vmem:[%s276 + $0x4] sm:$0xf]
        %v323 = vld [vmem:[%s276 + $0x8] sm:$0xf]
        %v324 = vld [vmem:[%s276 + $0xc] sm:$0xf]
        %v325 = vld [vmem:[%s276 + $0x10] sm:$0xf]
        %v326 = vld [vmem:[%s276 + $0x14] sm:$0xf]
        %v327 = vld [vmem:[%s276 + $0x18] sm:$0xf]
        %v328 = vld [vmem:[%s276 + $0x1c] sm:$0xf]
        %v329 = vld [vmem:[%s276 + $0x20] sm:$0xf]
        %v330 = vld [vmem:[%s276 + $0x24] sm:$0xf]
        %v331 = vld [vmem:[%s276 + $0x28] sm:$0xf]
        %v332 = vld [vmem:[%s276 + $0x2c] sm:$0xf]
        %v333 = vld [vmem:[%s276 + $0x30] sm:$0xf]
        %v334 = vld [vmem:[%s276 + $0x34] sm:$0xf]
        %v335 = vld [vmem:[%s276 + $0x38] sm:$0xf]
        %v336 = vld [vmem:[%s276 + $0x3c] sm:$0xf]
        %v337 = vld [vmem:[%s276 + $0x40] sm:$0xf]
        %v338 = vld [vmem:[%s276 + $0x44] sm:$0xf]
        %v339 = vld [vmem:[%s276 + $0x48] sm:$0xf]
        %v340 = vld [vmem:[%s276 + $0x4c] sm:$0xf]
        %v341 = vld [vmem:[%s276 + $0x50] sm:$0xf]
        %v342 = vld [vmem:[%s276 + $0x54] sm:$0xf]
        %v343 = vld [vmem:[%s276 + $0x58] sm:$0xf]
        %v344 = vld [vmem:[%s276 + $0x5c] sm:$0xf]
        %v345 = vld [vmem:[%s276 + $0x60] sm:$0xf]
        %v346 = vld [vmem:[%s276 + $0x64] sm:$0xf]
        %v347 = vld [vmem:[%s276 + $0x68] sm:$0xf]
        %v348 = vld [vmem:[%s276 + $0x6c] sm:$0xf]
        %v349 = vld [vmem:[%s276 + $0x70] sm:$0xf]
        %v350 = vld [vmem:[%s276 + $0x74] sm:$0xf]
        %v351 = vld [vmem:[%s276 + $0x78] sm:$0xf]
        %v352 = vld [vmem:[%s276 + $0x7c] sm:$0xf]
        %v353 = vld [vmem:[%s276 + $0x80] sm:$0xf]
        %v354 = vld [vmem:[%s276 + $0x84] sm:$0xf]
        %v355 = vld [vmem:[%s276 + $0x88] sm:$0xf]
        %v356 = vld [vmem:[%s276 + $0x8c] sm:$0xf]
        %v357 = vld [vmem:[%s276 + $0x90] sm:$0xf]
        %v358 = vld [vmem:[%s276 + $0x94] sm:$0xf]
        %v359 = vld [vmem:[%s276 + $0x98] sm:$0xf]
        %v360 = vld [vmem:[%s276 + $0x9c] sm:$0xf]
        %v361 = vld [vmem:[%s276 + $0xa0] sm:$0xf]
        %v362 = vld [vmem:[%s276 + $0xa4] sm:$0xf]
        %v363 = vld [vmem:[%s276 + $0xa8] sm:$0xf]
        %v364 = vld [vmem:[%s276 + $0xac] sm:$0xf]
        %v365 = vld [vmem:[%s276 + $0xb0] sm:$0xf]
        %v366 = vld [vmem:[%s276 + $0xb4] sm:$0xf]
        %v367 = vld [vmem:[%s276 + $0xb8] sm:$0xf]
        %v368 = vld [vmem:[%s276 + $0xbc] sm:$0xf]
        %v369 = vld [vmem:[%s276 + $0xc0] sm:$0xf]
        %v370 = vld [vmem:[%s276 + $0xc4] sm:$0xf]
        %v371 = vld [vmem:[%s276 + $0xc8] sm:$0xf]
        %v372 = vld [vmem:[%s276 + $0xcc] sm:$0xf]
        %v373 = vld [vmem:[%s276 + $0xd0] sm:$0xf]
        %v374 = vld [vmem:[%s276 + $0xd4] sm:$0xf]
        %v375 = vld [vmem:[%s276 + $0xd8] sm:$0xf]
        %v376 = vld [vmem:[%s276 + $0xdc] sm:$0xf]
        %v377 = vld [vmem:[%s276 + $0xe0] sm:$0xf]
        %v378 = vld [vmem:[%s276 + $0xe4] sm:$0xf]
        %v379 = vld [vmem:[%s276 + $0xe8] sm:$0xf]
        %v380 = vld [vmem:[%s276 + $0xec] sm:$0xf]
        %v381 = vld [vmem:[%s276 + $0xf0] sm:$0xf]
        %v382 = vld [vmem:[%s276 + $0xf4] sm:$0xf]
        %v383 = vld [vmem:[%s276 + $0xf8] sm:$0xf]
        %v384 = vld [vmem:[%s276 + $0xfc] sm:$0xf]
        %v389 = vunpack.c.l.b16 %v317
        %v390 = vunpack.c.h.b16 %v317
        %v391 = vunpack.c.l.b16 %v318
        %v392 = vunpack.c.h.b16 %v318
        %v393 = vunpack.c.l.b16 %v319
        %v394 = vunpack.c.h.b16 %v319
        %v395 = vunpack.c.l.b16 %v320
        %v396 = vunpack.c.h.b16 %v320
        %v397 = vpack.c.b16 %v393, %v389
        %v398 = vpack.c.b16 %v394, %v390
        %v399 = vpack.c.b16 %v395, %v391
        %v400 = vpack.c.b16 %v396, %v392
        %v469 = vunpack.c.l.b16 %v321
        %v470 = vunpack.c.l.b16 %v322
        %v471 = vunpack.c.l.b16 %v323
        %v472 = vunpack.c.l.b16 %v324
        %v473 = vunpack.c.l.b16 %v325
        %v474 = vunpack.c.l.b16 %v326
        %v475 = vunpack.c.l.b16 %v327
        %v476 = vunpack.c.l.b16 %v328
        %v477 = vunpack.c.l.b16 %v329
        %v478 = vunpack.c.l.b16 %v330
        %v479 = vunpack.c.l.b16 %v331
        %v480 = vunpack.c.l.b16 %v332
        %v481 = vunpack.c.l.b16 %v333
        %v482 = vunpack.c.l.b16 %v334
        %v483 = vunpack.c.l.b16 %v335
        %v484 = vunpack.c.l.b16 %v336
        %v485 = vunpack.c.l.b16 %v337
        %v486 = vunpack.c.l.b16 %v338
        %v487 = vunpack.c.l.b16 %v339
        %v488 = vunpack.c.l.b16 %v340
        %v489 = vunpack.c.l.b16 %v341
        %v490 = vunpack.c.l.b16 %v342
        %v491 = vunpack.c.l.b16 %v343
        %v492 = vunpack.c.l.b16 %v344
        %v493 = vunpack.c.l.b16 %v345
        %v494 = vunpack.c.l.b16 %v346
        %v495 = vunpack.c.l.b16 %v347
        %v496 = vunpack.c.l.b16 %v348
        %v497 = vunpack.c.l.b16 %v349
        %v498 = vunpack.c.l.b16 %v350
        %v499 = vunpack.c.l.b16 %v351
        %v500 = vunpack.c.l.b16 %v352
        %v501 = vunpack.c.l.b16 %v353
        %v502 = vunpack.c.l.b16 %v354
        %v503 = vunpack.c.l.b16 %v355
        %v504 = vunpack.c.l.b16 %v356
        %v505 = vunpack.c.l.b16 %v357
        %v506 = vunpack.c.l.b16 %v358
        %v507 = vunpack.c.l.b16 %v359
        %v508 = vunpack.c.l.b16 %v360
        %v509 = vunpack.c.l.b16 %v361
        %v510 = vunpack.c.l.b16 %v362
        %v511 = vunpack.c.l.b16 %v363
        %v512 = vunpack.c.l.b16 %v364
        %v513 = vunpack.c.l.b16 %v365
        %v514 = vunpack.c.l.b16 %v366
        %v515 = vunpack.c.l.b16 %v367
        %v516 = vunpack.c.l.b16 %v368
        %v517 = vunpack.c.l.b16 %v369
        %v518 = vunpack.c.l.b16 %v370
        %v519 = vunpack.c.l.b16 %v371
        %v520 = vunpack.c.l.b16 %v372
        %v521 = vunpack.c.l.b16 %v373
        %v522 = vunpack.c.l.b16 %v374
        %v523 = vunpack.c.l.b16 %v375
        %v524 = vunpack.c.l.b16 %v376
        %v525 = vunpack.c.l.b16 %v377
        %v526 = vunpack.c.l.b16 %v378
        %v527 = vunpack.c.l.b16 %v379
        %v528 = vunpack.c.l.b16 %v380
        %v529 = vunpack.c.l.b16 %v381
        %v530 = vunpack.c.l.b16 %v382
        %v531 = vunpack.c.l.b16 %v383
        %v532 = vunpack.c.l.b16 %v384
        %v533 = vpack.c.b16 %v470, %v469
        %v534 = vpack.c.b16 %v472, %v471
        %v535 = vpack.c.b16 %v474, %v473
        %v536 = vpack.c.b16 %v476, %v475
        %v537 = vpack.c.b16 %v478, %v477
        %v538 = vpack.c.b16 %v480, %v479
        %v539 = vpack.c.b16 %v482, %v481
        %v540 = vpack.c.b16 %v484, %v483
        %v541 = vpack.c.b16 %v486, %v485
        %v542 = vpack.c.b16 %v488, %v487
        %v543 = vpack.c.b16 %v490, %v489
        %v544 = vpack.c.b16 %v492, %v491
        %v545 = vpack.c.b16 %v494, %v493
        %v546 = vpack.c.b16 %v496, %v495
        %v547 = vpack.c.b16 %v498, %v497
        %v548 = vpack.c.b16 %v500, %v499
        %v549 = vpack.c.b16 %v502, %v501
        %v550 = vpack.c.b16 %v504, %v503
        %v551 = vpack.c.b16 %v506, %v505
        %v552 = vpack.c.b16 %v508, %v507
        %v553 = vpack.c.b16 %v510, %v509
        %v554 = vpack.c.b16 %v512, %v511
        %v555 = vpack.c.b16 %v514, %v513
        %v556 = vpack.c.b16 %v516, %v515
        %v557 = vpack.c.b16 %v518, %v517
        %v558 = vpack.c.b16 %v520, %v519
        %v559 = vpack.c.b16 %v522, %v521
        %v560 = vpack.c.b16 %v524, %v523
        %v561 = vpack.c.b16 %v526, %v525
        %v562 = vpack.c.b16 %v528, %v527
        %v563 = vpack.c.b16 %v530, %v529
        %v564 = vpack.c.b16 %v532, %v531
        %597 = vmatprep.subr.bf16.mxu0 0
        %598 = vmatpush1.bf16.msra.mxu0 %v540
        %599 = vmatprep.subr.bf16.mxu0 0
        %600 = vmatpush1.bf16.msra.mxu0 %v539
        %601 = vmatprep.subr.bf16.mxu0 0
        %602 = vmatpush1.bf16.msra.mxu0 %v538
        %603 = vmatprep.subr.bf16.mxu0 0
        %604 = vmatpush1.bf16.msra.mxu0 %v537
        %605 = vmatprep.subr.bf16.mxu0 0
        %606 = vmatpush1.bf16.msra.mxu0 %v536
        %607 = vmatprep.subr.bf16.mxu0 0
        %608 = vmatpush1.bf16.msra.mxu0 %v535
        %609 = vmatprep.subr.bf16.mxu0 0
        %610 = vmatpush1.bf16.msra.mxu0 %v534
        %611 = vmatprep.subr.bf16.mxu0 0
        %612 = vmatpush1.bf16.msra.mxu0 %v533
        %613 = vmatprep.subr.bf16.mxu0 0
        %614 = vmatpush2.bf16.msra.mxu0 %v548
        %615 = vmatprep.subr.bf16.mxu0 0
        %616 = vmatpush2.bf16.msra.mxu0 %v547
        %617 = vmatprep.subr.bf16.mxu0 0
        %618 = vmatpush2.bf16.msra.mxu0 %v546
        %619 = vmatprep.subr.bf16.mxu0 0
        %620 = vmatpush2.bf16.msra.mxu0 %v545
        %621 = vmatprep.subr.bf16.mxu0 0
        %622 = vmatpush2.bf16.msra.mxu0 %v544
        %623 = vmatprep.subr.bf16.mxu0 0
        %624 = vmatpush2.bf16.msra.mxu0 %v543
        %625 = vmatprep.subr.bf16.mxu0 0
        %626 = vmatpush2.bf16.msra.mxu0 %v542
        %627 = vmatprep.subr.bf16.mxu0 0
        %628 = vmatpush2.bf16.msra.mxu0 %v541
        %629 = vmatprep.mubr.bf16.mxu0 %v398
        %630 = vmatmul.mubr.bf16.gmra.mxu0 %v397
        %v631 = vpop.f32.mrf.mxu0
        %v632 = vadd.f32 0.0, %v631
        %v633 = vpop.f32.mrf.mxu0
        %v634 = vpop.f32.mrf.mxu0
        %v635 = vadd.f32 0.0, %v634
        %v636 = vpop.f32.mrf.mxu0
        %637 = vdwg.mxu0
        %638 = vmatprep.subr.bf16.mxu0 0
        %639 = vmatpush1.bf16.msra.mxu0 %v556
        %640 = vmatprep.subr.bf16.mxu0 0
        %641 = vmatpush1.bf16.msra.mxu0 %v555
        %642 = vmatprep.subr.bf16.mxu0 0
        %643 = vmatpush1.bf16.msra.mxu0 %v554
        %644 = vmatprep.subr.bf16.mxu0 0
        %645 = vmatpush1.bf16.msra.mxu0 %v553
        %646 = vmatprep.subr.bf16.mxu0 0
        %647 = vmatpush1.bf16.msra.mxu0 %v552
        %648 = vmatprep.subr.bf16.mxu0 0
        %649 = vmatpush1.bf16.msra.mxu0 %v551
        %650 = vmatprep.subr.bf16.mxu0 0
        %651 = vmatpush1.bf16.msra.mxu0 %v550
        %652 = vmatprep.subr.bf16.mxu0 0
        %653 = vmatpush1.bf16.msra.mxu0 %v549
        %654 = vmatprep.subr.bf16.mxu0 0
        %655 = vmatpush2.bf16.msra.mxu0 %v564
        %656 = vmatprep.subr.bf16.mxu0 0
        %657 = vmatpush2.bf16.msra.mxu0 %v563
        %658 = vmatprep.subr.bf16.mxu0 0
        %659 = vmatpush2.bf16.msra.mxu0 %v562
        %660 = vmatprep.subr.bf16.mxu0 0
        %661 = vmatpush2.bf16.msra.mxu0 %v561
        %662 = vmatprep.subr.bf16.mxu0 0
        %663 = vmatpush2.bf16.msra.mxu0 %v560
        %664 = vmatprep.subr.bf16.mxu0 0
        %665 = vmatpush2.bf16.msra.mxu0 %v559
        %666 = vmatprep.subr.bf16.mxu0 0
        %667 = vmatpush2.bf16.msra.mxu0 %v558
        %668 = vmatprep.subr.bf16.mxu0 0
        %669 = vmatpush2.bf16.msra.mxu0 %v557
        %670 = vmatprep.mubr.bf16.mxu0 %v400
        %671 = vmatmul.mubr.bf16.gmra.mxu0 %v399
        %v672 = vpop.f32.mrf.mxu0
        %v673 = vadd.f32 %v632, %v672
        %v674 = vpop.f32.mrf.mxu0
        %v675 = vpop.f32.mrf.mxu0
        %v676 = vadd.f32 %v635, %v675
        %v677 = vpop.f32.mrf.mxu0
        %678 = vdwg.mxu0
        %v679 = vld [vmem:[%s290] sm:$0xff]
        %v680 = vld [vmem:[%s290 + $0x8] sm:$0xff]
        %v681 = vlaneseq
        %v682 = vand.u32 %v681, 127
        %v683 = vstv %s305
        %v684 = vadd.s32 %v683, %v682
        %685 = vset.pattern.permute.xlu0 0
        %686 = vperm.xlu0 %685, %v679
        %v687 = vpop.permute.xlu0 %686
        %688 = vset.pattern.permute.xlu0 0
        %689 = vperm.xlu0 %688, %v680
        %v690 = vpop.permute.xlu0 %689
        %v691 = vsub.s32 %v684, %v687
        %v692 = vsub.s32 %v684, %v690
        %vm693 = vcmp.ge.s32.totalorder %v691, 0
        %vm694 = vcmp.ge.s32.totalorder %v692, 0
        %695 = vset.pattern.permute.xlu0 2
        %696 = vperm.xlu0 %695, %v679
        %v697 = vpop.permute.xlu0 %696
        %698 = vset.pattern.permute.xlu0 2
        %699 = vperm.xlu0 %698, %v680
        %v700 = vpop.permute.xlu0 %699
        %vm701 = vcmp.lt.s32.totalorder %v691, %v697
        %vm702 = vcmp.lt.s32.totalorder %v692, %v700
        %vm703 = vmand %vm693, %vm701
        %vm704 = vmand %vm694, %vm702
        %vm705 = vcmp.gt.s32.totalorder %v691, 0
        %v706 = vsel %vm705, %v691, 0
        %vm707 = vcmp.gt.s32.totalorder %v692, 0
        %v708 = vsel %vm707, %v692, 0
        %vm709 = vcmp.lt.s32.totalorder %v706, 30
        %v710 = vsel %vm709, %v706, 30
        %vm711 = vcmp.lt.s32.totalorder %v708, 30
        %v712 = vsel %vm711, %v708, 30
        %713 = vset.pattern.permute.xlu0 1
        %714 = vperm.xlu0 %713, %v679
        %v715 = vpop.permute.xlu0 %714
        %716 = vset.pattern.permute.xlu0 1
        %717 = vperm.xlu0 %716, %v680
        %v718 = vpop.permute.xlu0 %717
        %v719 = vshra.s32 %v715, %v710
        %v720 = vshra.s32 %v718, %v712
        %v721 = vand.u32 %v719, 1
        %v722 = vand.u32 %v720, 1
        %v723 = vcvt.s32.f32 %v721
        %v724 = vcvt.s32.f32 %v722
        %v725 = vmax.f32 %v673, 0.0
        %v726 = vmax.f32 %v676, 0.0
        %v727 = vmul.f32 %v673, %v723
        %v728 = vmul.f32 %v676, %v724
        %v729 = vsub.f32 %v725, %v727
        %v730 = vsub.f32 %v726, %v728
        %v731 = vand.u32 2147483647, %v673
        %v732 = vand.u32 2147483647, %v676
        %v733 = vsub.f32 0.0, %v731
        %v734 = vsub.f32 0.0, %v732
        %v735 = vmul.f32 %v733, 1.442695
        %v736 = vpow.pop %v735
        %v737 = vmul.f32 %v734, 1.442695
        %v738 = vpow.pop %v737
        %v739 = vadd.f32 %v736, 1.0
        %v740 = vlog2.pop %v739
        %v741 = vmul.f32 %v740, 0.6931472
        %v742 = vmul.f32 -0.5, %v736
        %v743 = vadd.f32 %v742, 1.0
        %v744 = vmul.f32 %v743, %v736
        %v745 = vand.u32 2147483647, %v736
        %vm746 = vcmp.lt.f32.partialorder %v745, 0.0004427343
        %v747 = vsel %vm746, %v744, %v741
        %v748 = vadd.f32 %v738, 1.0
        %v749 = vlog2.pop %v748
        %v750 = vmul.f32 %v749, 0.6931472
        %v751 = vmul.f32 -0.5, %v738
        %v752 = vadd.f32 %v751, 1.0
        %v753 = vmul.f32 %v752, %v738
        %v754 = vand.u32 2147483647, %v738
        %vm755 = vcmp.lt.f32.partialorder %v754, 0.0004427343
        %v756 = vsel %vm755, %v753, %v750
        %v757 = vadd.f32 %v729, %v747
        %v758 = vadd.f32 %v730, %v756
        %vm759 = vcmp.gt.s32.totalorder %v679, 1
        %v760 = vsel %vm759, %v679, 1
        %vm761 = vcmp.gt.s32.totalorder %v680, 1
        %v762 = vsel %vm761, %v680, 1
        %v763 = vcvt.s32.f32 %v760
        %v764 = vcvt.s32.f32 %v762
        %v765 = vmul.f32 %v763, 32.0
        %v766 = vmul.f32 %v764, 32.0
        %v767 = vrcp.pop %v765
        %v768 = vmul.f32 1.0, %v767
        %v769 = vrcp.pop %v766
        %v770 = vmul.f32 1.0, %v769
        %772 = vset.pattern.permute.xlu0 2
        %773 = vperm.xlu0 %772, %v768
        %v774 = vpop.permute.xlu0 %773
        %777 = vset.pattern.permute.xlu0 2
        %778 = vperm.xlu0 %777, %v770
        %v779 = vpop.permute.xlu0 %778
        %v781 = vsel %vm703, %v774, 0.0
        %v782 = vsel %vm704, %v779, 0.0
        %v783 = vld [vmem:[%s296] sm:$0xff]
        %v784 = vld [vmem:[%s296 + $0x8] sm:$0xff]
        %v785 = vmul.f32 %v757, %v781
        %v786 = vmul.f32 %v758, %v782
        %v787 = vadd.f32 %v783, %v785
        %v788 = vadd.f32 %v784, %v786
        %789 = vst [vmem:[%s296] sm:$0xff] %v787
        %790 = vst [vmem:[%s296 + $0x8] sm:$0xff] %v788
      $region40: #{hierarchical_softmax_loss.1} parent=31 // pred_fallthru
        _
      %s791 = smul.u32 2, %s25
      %p792 = scmp.lt.s32.totalorder %s791, 3
      %s793 = scalar_select %p792, %s791, 3
      %s794 = smul.addr %s793, 8
      %s795 = scalar_lea.vmem %s4, %s794
      // Predicated region
      $region41: #{hierarchical_softmax_loss.1} parent=31 // pred_check
        %p796 = pneg %p147
      $region42: #{hierarchical_softmax_loss.1} parent=31 // pred_check_branch
        %798 = sbr.rel (%p796) target = $region44
      $region43: #{hierarchical_softmax_loss.1} parent=31 // pred_region
        %s799 = smul.u32 2, %s25
      $region44: #{hierarchical_softmax_loss.1} parent=31 // pred_fallthru
        _
    $region32: #{hierarchical_softmax_loss.1} parent=5 // pred_fallthru
      _
    %p800 = scmp.le.s32.totalorder 2, %s16
    // Predicated region
    $region45: #{hierarchical_softmax_loss.1} parent=5 // pred_check
      %p801 = pneg %p800
    $region46: #{hierarchical_softmax_loss.1} parent=5 // pred_check_branch
      %803 = sbr.rel (%p801) target = $region48
    $region47: #{hierarchical_softmax_loss.1} parent=5 // pred_region
      %s804 = ssub.s32 %s16, 2
      // Predicated region
      $region49: #{hierarchical_softmax_loss.1} parent=47 // pred_check
        %p805 = pneg %p153
      $region50: #{hierarchical_softmax_loss.1} parent=47 // pred_check_branch
        %807 = sbr.rel (%p805) target = $region52
      $region51: #{hierarchical_softmax_loss.1} parent=47 // pred_region
        %s808 = smul.u32 2, %s27
        %p809 = scmp.lt.s32.totalorder %s808, 3
        %s810 = scalar_select %p809, %s808, 3
        %s811 = smul.addr %s810, 8
        %s812 = scalar_lea.vmem %s4, %s811
      $region52: #{hierarchical_softmax_loss.1} parent=47 // pred_fallthru
        _
    $region48: #{hierarchical_softmax_loss.1} parent=5 // pred_fallthru
      _
  $region6: #{hierarchical_softmax_loss.1} parent=0 // loop_footer
    %s20 = sadd.s32 1, %s16
  $region7: #{hierarchical_softmax_loss.1} parent=0 // loop_footer_branch
    %15 = sbr.rel target = $region3
  $region8: #{hierarchical_softmax_loss.1} parent=0 // loop_exit
    _

</llo_original>
